<compile_context>
chip_gen: v7x
topology: tpu7x:2x2x1
jax: 0.10.0
libtpu: 0.0.40
codegen_flags: <defaults>
</compile_context>

<pallas_src>
import functools

import jax
import jax.numpy as jnp
from jax.experimental import pallas as pl
from jax.experimental.pallas import tpu as pltpu


def _kmax_kernel(x_ref, o_ref, *, k):
    """x_ref: (L, TR) block -- pooled axis on sublanes, rows on lanes.
    o_ref: (k, TR) -- the k largest values per row, in positional order."""
    xv = x_ref[...]                                     # (L, TR), native dtype
    L, TR = xv.shape

    if jnp.issubdtype(xv.dtype, jnp.floating):
        minval = jnp.array(-jnp.inf, dtype=xv.dtype)
    else:
        minval = jnp.array(jnp.iinfo(xv.dtype).min, dtype=xv.dtype)

    # Position of each element along the pooled axis (hoisted, reused).
    row_idx = jax.lax.broadcasted_iota(jnp.int32, (L, TR), 0)

    # --- Pass 1: mark the top-k positions (ties -> lowest index). O(k*L). ---
    remaining = jnp.ones((L, TR), dtype=jnp.bool_)
    for _ in range(k):                                  # k is small and static
        masked = jnp.where(remaining, xv, minval)       # (L, TR)
        mx = jnp.max(masked, axis=0, keepdims=True)     # (1, TR) lane-dense
        is_max = jnp.logical_and(remaining, masked == mx)
        first = jnp.min(jnp.where(is_max, row_idx, L),  # lowest index at max
                        axis=0, keepdims=True)          # (1, TR)
        remaining = jnp.logical_and(remaining, row_idx != first)
    selected = jnp.logical_not(remaining)               # exactly k per row

    # --- Pass 2: emit selected values in original positional order. O(k*L). --
    zero = jnp.zeros((), dtype=xv.dtype)
    sel = selected
    for m in range(k):
        first = jnp.min(jnp.where(sel, row_idx, L), axis=0, keepdims=True)
        pick = row_idx == first                         # one-hot (or empty)
        # select + sum (NOT multiply): unselected +/-inf stays inert.
        val = jnp.sum(jnp.where(pick, xv, zero), axis=0, keepdims=True)
        o_ref[m:m + 1, :] = val.astype(o_ref.dtype)     # lane-dense (1, TR)
        sel = jnp.logical_and(sel, row_idx != first)


def _kmax_rows(xt, k):
    """xt: (L, R) -- pool along axis 0; independent rows along axis 1 (lanes)."""
    L, R = xt.shape

    # Row-tile size: full width for small R (single tile, no constraint);
    # otherwise a lane-dense multiple of 128, shrunk when L is long so the
    # (L, TR) working set stays a few MiB (fits v7x / v5e scoped VMEM).
    if R <= 256:
        tr = R
    else:
        tr = 256 if L <= 2048 else 128
    r_pad = -(-R // tr) * tr
    if r_pad != R:
        xt = jnp.pad(xt, ((0, 0), (0, r_pad - R)))      # padded rows discarded

    out = pl.pallas_call(
        functools.partial(_kmax_kernel, k=k),
        out_shape=jax.ShapeDtypeStruct((k, r_pad), xt.dtype),
        grid=(r_pad // tr,),
        in_specs=[pl.BlockSpec((L, tr), lambda r: (0, r))],
        out_specs=pl.BlockSpec((k, tr), lambda r: (0, r)),
        compiler_params=pltpu.CompilerParams(
            dimension_semantics=("parallel",)),
    )(xt)
    return out[:, :R]


def kmax_pooling(x, k, dim):
    """KMaxPooling(k, dim)(x) for an arbitrary-rank input."""
    dim = dim % x.ndim
    L = x.shape[dim]
    if k > L:
        raise ValueError(f"k={k} exceeds size {L} of dim {dim}")

    # Layout plumbing (wrapper-side): pooled axis -> sublanes, all other axes
    # flattened onto the lane axis so kernel compute and stores are lane-dense.
    x_m = jnp.moveaxis(x, dim, -1)                      # (..., L)
    lead = x_m.shape[:-1]
    rows = 1
    for s in lead:
        rows *= s
    xt = jnp.transpose(x_m.reshape(rows, L))            # (L, rows)

    out_t = _kmax_rows(xt, k)                           # (k, rows)
    out = jnp.transpose(out_t).reshape(lead + (k,))     # (..., k)
    return jnp.moveaxis(out, -1, dim)


def _reference(x, k, dim):
    # Pure-JAX reference: top_k -> sort indices -> gather (matches torch).
    x_m = jnp.moveaxis(x, dim, -1)
    _, idx = jax.lax.top_k(x_m, k)
    idx = jnp.sort(idx, axis=-1)
    out = jnp.take_along_axis(x_m, idx, axis=-1)
    return jnp.moveaxis(out, -1, dim)


if __name__ == "__main__":
    key = jax.random.PRNGKey(0)
    B, C, L = 2, 4, 16
    k, dim = 5, 2
    x = jax.random.normal(key, (B, C, L), dtype=jnp.float32)

    out = jax.block_until_ready(kmax_pooling(x, k, dim))
    ref = _reference(x, k, dim)
    assert out.shape == (B, C, k), out.shape
    assert jnp.allclose(out, ref), "mismatch vs reference (dim=2)"

    # Also exercise pooling over a non-trailing dim.
    k2, dim2 = 3, 1
    out2 = jax.block_until_ready(kmax_pooling(x, k2, dim2))
    ref2 = _reference(x, k2, dim2)
    assert out2.shape == (B, k2, L), out2.shape
    assert jnp.allclose(out2, ref2), "mismatch vs reference (dim=1)"

    print("KERNEL_OK")
</pallas_src>

<mosaic_0001>
module attributes {stable_mosaic.version = 11 : i64} {
  func.func @_kmax_kernel(%arg0: i32, %arg1: memref<16x8xf32, #tpu.memory_space<vmem>>, %arg2: memref<5x8xf32, #tpu.memory_space<vmem>>) attributes {dimension_semantics = [#tpu.dimension_semantics<parallel>], iteration_bounds = array<i64: 1>, scalar_prefetch = 0 : i64, scratch_operands = 0 : i64, tpu.core_type = #tpu.core_type<tc>, window_params = [{transform_indices = @transform_0, window_bounds = array<i64: 16, 8>}, {transform_indices = @transform_1, window_bounds = array<i64: 5, 8>}]} {
    %c0 = arith.constant 0 : index
    %c0_0 = arith.constant 0 : index
    %0 = vector.load %arg1[%c0, %c0_0] : memref<16x8xf32, #tpu.memory_space<vmem>>, vector<16x8xf32>
    %1 = tpu.iota {dimensions = array<i32: 0>} : vector<16x8xi32>
    %true = arith.constant true
    %2 = vector.broadcast %true : i1 to vector<16x8xi1>
    %cst = arith.constant 0xFF800000 : f32
    %3 = vector.broadcast %cst : f32 to vector<16x8xf32>
    %4 = arith.select %2, %0, %3 : vector<16x8xi1>, vector<16x8xf32>
    %cst_1 = arith.constant dense<0xFF800000> : vector<8xf32>
    %5 = vector.multi_reduction <maximumf>, %4, %cst_1 [0] : vector<16x8xf32> to vector<8xf32>
    %6 = vector.shape_cast %5 : vector<8xf32> to vector<1x8xf32>
    %7 = vector.broadcast %6 : vector<1x8xf32> to vector<16x8xf32>
    %8 = arith.cmpf oeq, %4, %7 : vector<16x8xf32>
    %9 = arith.andi %2, %8 : vector<16x8xi1>
    %c16_i32 = arith.constant 16 : i32
    %10 = vector.broadcast %c16_i32 : i32 to vector<16x8xi32>
    %11 = arith.select %9, %1, %10 : vector<16x8xi1>, vector<16x8xi32>
    %cst_2 = arith.constant dense<2147483647> : vector<8xi32>
    %12 = vector.multi_reduction <minsi>, %11, %cst_2 [0] : vector<16x8xi32> to vector<8xi32>
    %13 = vector.shape_cast %12 : vector<8xi32> to vector<1x8xi32>
    %14 = vector.broadcast %13 : vector<1x8xi32> to vector<16x8xi32>
    %15 = arith.cmpi ne, %1, %14 : vector<16x8xi32>
    %16 = arith.andi %2, %15 : vector<16x8xi1>
    %cst_3 = arith.constant 0xFF800000 : f32
    %17 = vector.broadcast %cst_3 : f32 to vector<16x8xf32>
    %18 = arith.select %16, %0, %17 : vector<16x8xi1>, vector<16x8xf32>
    %cst_4 = arith.constant dense<0xFF800000> : vector<8xf32>
    %19 = vector.multi_reduction <maximumf>, %18, %cst_4 [0] : vector<16x8xf32> to vector<8xf32>
    %20 = vector.shape_cast %19 : vector<8xf32> to vector<1x8xf32>
    %21 = vector.broadcast %20 : vector<1x8xf32> to vector<16x8xf32>
    %22 = arith.cmpf oeq, %18, %21 : vector<16x8xf32>
    %23 = arith.andi %16, %22 : vector<16x8xi1>
    %c16_i32_5 = arith.constant 16 : i32
    %24 = vector.broadcast %c16_i32_5 : i32 to vector<16x8xi32>
    %25 = arith.select %23, %1, %24 : vector<16x8xi1>, vector<16x8xi32>
    %cst_6 = arith.constant dense<2147483647> : vector<8xi32>
    %26 = vector.multi_reduction <minsi>, %25, %cst_6 [0] : vector<16x8xi32> to vector<8xi32>
    %27 = vector.shape_cast %26 : vector<8xi32> to vector<1x8xi32>
    %28 = vector.broadcast %27 : vector<1x8xi32> to vector<16x8xi32>
    %29 = arith.cmpi ne, %1, %28 : vector<16x8xi32>
    %30 = arith.andi %16, %29 : vector<16x8xi1>
    %cst_7 = arith.constant 0xFF800000 : f32
    %31 = vector.broadcast %cst_7 : f32 to vector<16x8xf32>
    %32 = arith.select %30, %0, %31 : vector<16x8xi1>, vector<16x8xf32>
    %cst_8 = arith.constant dense<0xFF800000> : vector<8xf32>
    %33 = vector.multi_reduction <maximumf>, %32, %cst_8 [0] : vector<16x8xf32> to vector<8xf32>
    %34 = vector.shape_cast %33 : vector<8xf32> to vector<1x8xf32>
    %35 = vector.broadcast %34 : vector<1x8xf32> to vector<16x8xf32>
    %36 = arith.cmpf oeq, %32, %35 : vector<16x8xf32>
    %37 = arith.andi %30, %36 : vector<16x8xi1>
    %c16_i32_9 = arith.constant 16 : i32
    %38 = vector.broadcast %c16_i32_9 : i32 to vector<16x8xi32>
    %39 = arith.select %37, %1, %38 : vector<16x8xi1>, vector<16x8xi32>
    %cst_10 = arith.constant dense<2147483647> : vector<8xi32>
    %40 = vector.multi_reduction <minsi>, %39, %cst_10 [0] : vector<16x8xi32> to vector<8xi32>
    %41 = vector.shape_cast %40 : vector<8xi32> to vector<1x8xi32>
    %42 = vector.broadcast %41 : vector<1x8xi32> to vector<16x8xi32>
    %43 = arith.cmpi ne, %1, %42 : vector<16x8xi32>
    %44 = arith.andi %30, %43 : vector<16x8xi1>
    %cst_11 = arith.constant 0xFF800000 : f32
    %45 = vector.broadcast %cst_11 : f32 to vector<16x8xf32>
    %46 = arith.select %44, %0, %45 : vector<16x8xi1>, vector<16x8xf32>
    %cst_12 = arith.constant dense<0xFF800000> : vector<8xf32>
    %47 = vector.multi_reduction <maximumf>, %46, %cst_12 [0] : vector<16x8xf32> to vector<8xf32>
    %48 = vector.shape_cast %47 : vector<8xf32> to vector<1x8xf32>
    %49 = vector.broadcast %48 : vector<1x8xf32> to vector<16x8xf32>
    %50 = arith.cmpf oeq, %46, %49 : vector<16x8xf32>
    %51 = arith.andi %44, %50 : vector<16x8xi1>
    %c16_i32_13 = arith.constant 16 : i32
    %52 = vector.broadcast %c16_i32_13 : i32 to vector<16x8xi32>
    %53 = arith.select %51, %1, %52 : vector<16x8xi1>, vector<16x8xi32>
    %cst_14 = arith.constant dense<2147483647> : vector<8xi32>
    %54 = vector.multi_reduction <minsi>, %53, %cst_14 [0] : vector<16x8xi32> to vector<8xi32>
    %55 = vector.shape_cast %54 : vector<8xi32> to vector<1x8xi32>
    %56 = vector.broadcast %55 : vector<1x8xi32> to vector<16x8xi32>
    %57 = arith.cmpi ne, %1, %56 : vector<16x8xi32>
    %58 = arith.andi %44, %57 : vector<16x8xi1>
    %cst_15 = arith.constant 0xFF800000 : f32
    %59 = vector.broadcast %cst_15 : f32 to vector<16x8xf32>
    %60 = arith.select %58, %0, %59 : vector<16x8xi1>, vector<16x8xf32>
    %cst_16 = arith.constant dense<0xFF800000> : vector<8xf32>
    %61 = vector.multi_reduction <maximumf>, %60, %cst_16 [0] : vector<16x8xf32> to vector<8xf32>
    %62 = vector.shape_cast %61 : vector<8xf32> to vector<1x8xf32>
    %63 = vector.broadcast %62 : vector<1x8xf32> to vector<16x8xf32>
    %64 = arith.cmpf oeq, %60, %63 : vector<16x8xf32>
    %65 = arith.andi %58, %64 : vector<16x8xi1>
    %c16_i32_17 = arith.constant 16 : i32
    %66 = vector.broadcast %c16_i32_17 : i32 to vector<16x8xi32>
    %67 = arith.select %65, %1, %66 : vector<16x8xi1>, vector<16x8xi32>
    %cst_18 = arith.constant dense<2147483647> : vector<8xi32>
    %68 = vector.multi_reduction <minsi>, %67, %cst_18 [0] : vector<16x8xi32> to vector<8xi32>
    %69 = vector.shape_cast %68 : vector<8xi32> to vector<1x8xi32>
    %70 = vector.broadcast %69 : vector<1x8xi32> to vector<16x8xi32>
    %71 = arith.cmpi ne, %1, %70 : vector<16x8xi32>
    %72 = arith.andi %58, %71 : vector<16x8xi1>
    %cst_19 = arith.constant dense<true> : vector<16x8xi1>
    %73 = arith.xori %72, %cst_19 : vector<16x8xi1>
    %c16_i32_20 = arith.constant 16 : i32
    %74 = vector.broadcast %c16_i32_20 : i32 to vector<16x8xi32>
    %75 = arith.select %73, %1, %74 : vector<16x8xi1>, vector<16x8xi32>
    %cst_21 = arith.constant dense<2147483647> : vector<8xi32>
    %76 = vector.multi_reduction <minsi>, %75, %cst_21 [0] : vector<16x8xi32> to vector<8xi32>
    %77 = vector.shape_cast %76 : vector<8xi32> to vector<1x8xi32>
    %78 = vector.broadcast %77 : vector<1x8xi32> to vector<16x8xi32>
    %79 = arith.cmpi eq, %1, %78 : vector<16x8xi32>
    %cst_22 = arith.constant 0.000000e+00 : f32
    %80 = vector.broadcast %cst_22 : f32 to vector<16x8xf32>
    %81 = arith.select %79, %0, %80 : vector<16x8xi1>, vector<16x8xf32>
    %cst_23 = arith.constant dense<0.000000e+00> : vector<8xf32>
    %82 = vector.multi_reduction <add>, %81, %cst_23 [0] : vector<16x8xf32> to vector<8xf32>
    %83 = vector.shape_cast %82 : vector<8xf32> to vector<1x8xf32>
    %c0_24 = arith.constant 0 : index
    %c0_25 = arith.constant 0 : index
    %84 = vector.load %arg2[%c0_24, %c0_25] : memref<5x8xf32, #tpu.memory_space<vmem>>, vector<1x8xf32>
    tpu.vector_store %arg2[%c0_24, %c0_25], %83 {strides = array<i32>} : memref<5x8xf32, #tpu.memory_space<vmem>>, vector<1x8xf32>,
    %85 = vector.broadcast %77 : vector<1x8xi32> to vector<16x8xi32>
    %86 = arith.cmpi ne, %1, %85 : vector<16x8xi32>
    %87 = arith.andi %73, %86 : vector<16x8xi1>
    %c16_i32_26 = arith.constant 16 : i32
    %88 = vector.broadcast %c16_i32_26 : i32 to vector<16x8xi32>
    %89 = arith.select %87, %1, %88 : vector<16x8xi1>, vector<16x8xi32>
    %cst_27 = arith.constant dense<2147483647> : vector<8xi32>
    %90 = vector.multi_reduction <minsi>, %89, %cst_27 [0] : vector<16x8xi32> to vector<8xi32>
    %91 = vector.shape_cast %90 : vector<8xi32> to vector<1x8xi32>
    %92 = vector.broadcast %91 : vector<1x8xi32> to vector<16x8xi32>
    %93 = arith.cmpi eq, %1, %92 : vector<16x8xi32>
    %cst_28 = arith.constant 0.000000e+00 : f32
    %94 = vector.broadcast %cst_28 : f32 to vector<16x8xf32>
    %95 = arith.select %93, %0, %94 : vector<16x8xi1>, vector<16x8xf32>
    %cst_29 = arith.constant dense<0.000000e+00> : vector<8xf32>
    %96 = vector.multi_reduction <add>, %95, %cst_29 [0] : vector<16x8xf32> to vector<8xf32>
    %97 = vector.shape_cast %96 : vector<8xf32> to vector<1x8xf32>
    %c1 = arith.constant 1 : index
    %c0_30 = arith.constant 0 : index
    %98 = vector.load %arg2[%c1, %c0_30] : memref<5x8xf32, #tpu.memory_space<vmem>>, vector<1x8xf32>
    tpu.vector_store %arg2[%c1, %c0_30], %97 {strides = array<i32>} : memref<5x8xf32, #tpu.memory_space<vmem>>, vector<1x8xf32>,
    %99 = vector.broadcast %91 : vector<1x8xi32> to vector<16x8xi32>
    %100 = arith.cmpi ne, %1, %99 : vector<16x8xi32>
    %101 = arith.andi %87, %100 : vector<16x8xi1>
    %c16_i32_31 = arith.constant 16 : i32
    %102 = vector.broadcast %c16_i32_31 : i32 to vector<16x8xi32>
    %103 = arith.select %101, %1, %102 : vector<16x8xi1>, vector<16x8xi32>
    %cst_32 = arith.constant dense<2147483647> : vector<8xi32>
    %104 = vector.multi_reduction <minsi>, %103, %cst_32 [0] : vector<16x8xi32> to vector<8xi32>
    %105 = vector.shape_cast %104 : vector<8xi32> to vector<1x8xi32>
    %106 = vector.broadcast %105 : vector<1x8xi32> to vector<16x8xi32>
    %107 = arith.cmpi eq, %1, %106 : vector<16x8xi32>
    %cst_33 = arith.constant 0.000000e+00 : f32
    %108 = vector.broadcast %cst_33 : f32 to vector<16x8xf32>
    %109 = arith.select %107, %0, %108 : vector<16x8xi1>, vector<16x8xf32>
    %cst_34 = arith.constant dense<0.000000e+00> : vector<8xf32>
    %110 = vector.multi_reduction <add>, %109, %cst_34 [0] : vector<16x8xf32> to vector<8xf32>
    %111 = vector.shape_cast %110 : vector<8xf32> to vector<1x8xf32>
    %c2 = arith.constant 2 : index
    %c0_35 = arith.constant 0 : index
    %112 = vector.load %arg2[%c2, %c0_35] : memref<5x8xf32, #tpu.memory_space<vmem>>, vector<1x8xf32>
    tpu.vector_store %arg2[%c2, %c0_35], %111 {strides = array<i32>} : memref<5x8xf32, #tpu.memory_space<vmem>>, vector<1x8xf32>,
    %113 = vector.broadcast %105 : vector<1x8xi32> to vector<16x8xi32>
    %114 = arith.cmpi ne, %1, %113 : vector<16x8xi32>
    %115 = arith.andi %101, %114 : vector<16x8xi1>
    %c16_i32_36 = arith.constant 16 : i32
    %116 = vector.broadcast %c16_i32_36 : i32 to vector<16x8xi32>
    %117 = arith.select %115, %1, %116 : vector<16x8xi1>, vector<16x8xi32>
    %cst_37 = arith.constant dense<2147483647> : vector<8xi32>
    %118 = vector.multi_reduction <minsi>, %117, %cst_37 [0] : vector<16x8xi32> to vector<8xi32>
    %119 = vector.shape_cast %118 : vector<8xi32> to vector<1x8xi32>
    %120 = vector.broadcast %119 : vector<1x8xi32> to vector<16x8xi32>
    %121 = arith.cmpi eq, %1, %120 : vector<16x8xi32>
    %cst_38 = arith.constant 0.000000e+00 : f32
    %122 = vector.broadcast %cst_38 : f32 to vector<16x8xf32>
    %123 = arith.select %121, %0, %122 : vector<16x8xi1>, vector<16x8xf32>
    %cst_39 = arith.constant dense<0.000000e+00> : vector<8xf32>
    %124 = vector.multi_reduction <add>, %123, %cst_39 [0] : vector<16x8xf32> to vector<8xf32>
    %125 = vector.shape_cast %124 : vector<8xf32> to vector<1x8xf32>
    %c3 = arith.constant 3 : index
    %c0_40 = arith.constant 0 : index
    %126 = vector.load %arg2[%c3, %c0_40] : memref<5x8xf32, #tpu.memory_space<vmem>>, vector<1x8xf32>
    tpu.vector_store %arg2[%c3, %c0_40], %125 {strides = array<i32>} : memref<5x8xf32, #tpu.memory_space<vmem>>, vector<1x8xf32>,
    %127 = vector.broadcast %119 : vector<1x8xi32> to vector<16x8xi32>
    %128 = arith.cmpi ne, %1, %127 : vector<16x8xi32>
    %129 = arith.andi %115, %128 : vector<16x8xi1>
    %c16_i32_41 = arith.constant 16 : i32
    %130 = vector.broadcast %c16_i32_41 : i32 to vector<16x8xi32>
    %131 = arith.select %129, %1, %130 : vector<16x8xi1>, vector<16x8xi32>
    %cst_42 = arith.constant dense<2147483647> : vector<8xi32>
    %132 = vector.multi_reduction <minsi>, %131, %cst_42 [0] : vector<16x8xi32> to vector<8xi32>
    %133 = vector.shape_cast %132 : vector<8xi32> to vector<1x8xi32>
    %134 = vector.broadcast %133 : vector<1x8xi32> to vector<16x8xi32>
    %135 = arith.cmpi eq, %1, %134 : vector<16x8xi32>
    %cst_43 = arith.constant 0.000000e+00 : f32
    %136 = vector.broadcast %cst_43 : f32 to vector<16x8xf32>
    %137 = arith.select %135, %0, %136 : vector<16x8xi1>, vector<16x8xf32>
    %cst_44 = arith.constant dense<0.000000e+00> : vector<8xf32>
    %138 = vector.multi_reduction <add>, %137, %cst_44 [0] : vector<16x8xf32> to vector<8xf32>
    %139 = vector.shape_cast %138 : vector<8xf32> to vector<1x8xf32>
    %c4 = arith.constant 4 : index
    %c0_45 = arith.constant 0 : index
    %140 = vector.load %arg2[%c4, %c0_45] : memref<5x8xf32, #tpu.memory_space<vmem>>, vector<1x8xf32>
    tpu.vector_store %arg2[%c4, %c0_45], %139 {strides = array<i32>} : memref<5x8xf32, #tpu.memory_space<vmem>>, vector<1x8xf32>,
    return
  }
  func.func @transform_0(%arg0: i32) -> (i32, i32) {
    %c0_i32 = arith.constant 0 : i32
    %c0_i32_0 = arith.constant 0 : i32
    return %c0_i32, %arg0 : i32, i32
  }
  func.func @transform_1(%arg0: i32) -> (i32, i32) {
    %c0_i32 = arith.constant 0 : i32
    %c0_i32_0 = arith.constant 0 : i32
    return %c0_i32, %arg0 : i32, i32
  }
}

</mosaic_0001>

<llo_original>
// kernel: tpu_custom_call.1
$region0: #{tpu_custom_call.1}
  #allocation0 [shape = 'u32[]', space=smem, size = 0x4, offset = 0x4, fixed_abs, tag = 'smem constant byte address 0x4 - core index']
  #allocation1 [shape = 'u32[144,128]{1,0:T(1,128)}', space=vmem, size = 0x12000, scoped, tag = 'internal scratch']
  %s0 = inlined_call_operand.vmem [shape: f32[16,8], index: 0, kind: input, shape index: {}]
  %s1 = inlined_call_operand.hbm [shape: f32[5,8], index: 1, kind: output, shape index: {}]
  %s2 = sld [smem:[#allocation0]]
  $region14: #{tpu_custom_call.1} parent=0
    _
  %s4 = ssub.s32 1, %s2
  %s5 = scalar_select 0, %s4, %s2
  $region1: #{tpu_custom_call.1} parent=0
    #allocation2 [shape = 'u8[4096]{0}', space=vmem, size = 0x1000, scoped, tag = 'output window, operand 0, single buffered']
    #allocation3 [shape = 's32[1]{0}', space=sflag, size = 0x4, scoped, tag = 'scoped memory for tpu_custom_call.1']
    %6 = vsyncpa [#allocation3], 0
    // Predicated region
    $region2: #{tpu_custom_call.1} parent=1 // pred_check
      _
    $region3: #{tpu_custom_call.1} parent=1 // pred_check_branch
      %8 = sbr.rel (0) target = $region5
    $region4: #{tpu_custom_call.1} parent=1 // pred_region
      _
    $region5: #{tpu_custom_call.1} parent=1 // pred_fallthru
      _
    %v9 = vld [vmem:[%s0] sm:$0xff]
    %v10 = vld [vmem:[%s0 + $0x8] sm:$0xff]
    %v11 = vlaneseq
    %v12 = vshrl.u32 %v11, 7
    %v13 = vadd.s32 %v12, 8
    %vm14 = vcmask 64512
    %v15 = vsel %vm14, %v9, -inf
    %v16 = vsel %vm14, %v10, -inf
    %v17 = vmax.f32 %v15, %v16
    %v18 = vrot.slane %v17, 4
    %v19 = vmax.f32 %v17, %v18
    %v20 = vrot.slane %v19, 2
    %v21 = vmax.f32 %v19, %v20
    %v22 = vrot.slane %v21, 1
    %v23 = vmax.f32 %v21, %v22
    %vm24 = vcmp.eq.f32.partialorder %v9, %v23
    %vm25 = vcmp.eq.f32.partialorder %v10, %v23
    %v26 = vsel %vm24, %v12, 16
    %v27 = vsel %vm25, %v13, 16
    %v28 = vsel %vm14, %v26, 2147483647
    %v29 = vsel %vm14, %v27, 2147483647
    %vm30 = vcmp.lt.s32.totalorder %v28, %v29
    %v31 = vsel %vm30, %v28, %v29
    %v32 = vrot.slane %v31, 4
    %vm33 = vcmp.lt.s32.totalorder %v31, %v32
    %v34 = vsel %vm33, %v31, %v32
    %v35 = vrot.slane %v34, 2
    %vm36 = vcmp.lt.s32.totalorder %v34, %v35
    %v37 = vsel %vm36, %v34, %v35
    %v38 = vrot.slane %v37, 1
    %vm39 = vcmp.lt.s32.totalorder %v37, %v38
    %v40 = vsel %vm39, %v37, %v38
    %vm41 = vcmp.ne.s32.totalorder %v12, %v40
    %vm42 = vcmp.ne.s32.totalorder %v13, %v40
    %v43 = vsel %vm41, %v9, -inf
    %v44 = vsel %vm42, %v10, -inf
    %v45 = vsel %vm14, %v43, -inf
    %v46 = vsel %vm14, %v44, -inf
    %v47 = vmax.f32 %v45, %v46
    %v48 = vrot.slane %v47, 4
    %v49 = vmax.f32 %v47, %v48
    %v50 = vrot.slane %v49, 2
    %v51 = vmax.f32 %v49, %v50
    %v52 = vrot.slane %v51, 1
    %v53 = vmax.f32 %v51, %v52
    %vm54 = vcmp.eq.f32.partialorder %v43, %v53
    %vm55 = vcmp.eq.f32.partialorder %v44, %v53
    %vm56 = vmand %vm41, %vm54
    %vm57 = vmand %vm42, %vm55
    %v58 = vsel %vm56, %v12, 16
    %v59 = vsel %vm57, %v13, 16
    %v60 = vsel %vm14, %v58, 2147483647
    %v61 = vsel %vm14, %v59, 2147483647
    %vm62 = vcmp.lt.s32.totalorder %v60, %v61
    %v63 = vsel %vm62, %v60, %v61
    %v64 = vrot.slane %v63, 4
    %vm65 = vcmp.lt.s32.totalorder %v63, %v64
    %v66 = vsel %vm65, %v63, %v64
    %v67 = vrot.slane %v66, 2
    %vm68 = vcmp.lt.s32.totalorder %v66, %v67
    %v69 = vsel %vm68, %v66, %v67
    %v70 = vrot.slane %v69, 1
    %vm71 = vcmp.lt.s32.totalorder %v69, %v70
    %v72 = vsel %vm71, %v69, %v70
    %vm73 = vcmp.ne.s32.totalorder %v12, %v72
    %vm74 = vcmp.ne.s32.totalorder %v13, %v72
    %vm75 = vmand %vm41, %vm73
    %vm76 = vmand %vm42, %vm74
    %v77 = vsel %vm75, %v9, -inf
    %v78 = vsel %vm76, %v10, -inf
    %v79 = vsel %vm14, %v77, -inf
    %v80 = vsel %vm14, %v78, -inf
    %v81 = vmax.f32 %v79, %v80
    %v82 = vrot.slane %v81, 4
    %v83 = vmax.f32 %v81, %v82
    %v84 = vrot.slane %v83, 2
    %v85 = vmax.f32 %v83, %v84
    %v86 = vrot.slane %v85, 1
    %v87 = vmax.f32 %v85, %v86
    %vm88 = vcmp.eq.f32.partialorder %v77, %v87
    %vm89 = vcmp.eq.f32.partialorder %v78, %v87
    %vm90 = vmand %vm75, %vm88
    %vm91 = vmand %vm76, %vm89
    %v92 = vsel %vm90, %v12, 16
    %v93 = vsel %vm91, %v13, 16
    %v94 = vsel %vm14, %v92, 2147483647
    %v95 = vsel %vm14, %v93, 2147483647
    %vm96 = vcmp.lt.s32.totalorder %v94, %v95
    %v97 = vsel %vm96, %v94, %v95
    %v98 = vrot.slane %v97, 4
    %vm99 = vcmp.lt.s32.totalorder %v97, %v98
    %v100 = vsel %vm99, %v97, %v98
    %v101 = vrot.slane %v100, 2
    %vm102 = vcmp.lt.s32.totalorder %v100, %v101
    %v103 = vsel %vm102, %v100, %v101
    %v104 = vrot.slane %v103, 1
    %vm105 = vcmp.lt.s32.totalorder %v103, %v104
    %v106 = vsel %vm105, %v103, %v104
    %vm107 = vcmp.ne.s32.totalorder %v12, %v106
    %vm108 = vcmp.ne.s32.totalorder %v13, %v106
    %vm109 = vmand %vm75, %vm107
    %vm110 = vmand %vm76, %vm108
    %v111 = vsel %vm109, %v9, -inf
    %v112 = vsel %vm110, %v10, -inf
    %v113 = vsel %vm14, %v111, -inf
    %v114 = vsel %vm14, %v112, -inf
    %v115 = vmax.f32 %v113, %v114
    %v116 = vrot.slane %v115, 4
    %v117 = vmax.f32 %v115, %v116
    %v118 = vrot.slane %v117, 2
    %v119 = vmax.f32 %v117, %v118
    %v120 = vrot.slane %v119, 1
    %v121 = vmax.f32 %v119, %v120
    %vm122 = vcmp.eq.f32.partialorder %v111, %v121
    %vm123 = vcmp.eq.f32.partialorder %v112, %v121
    %vm124 = vmand %vm109, %vm122
    %vm125 = vmand %vm110, %vm123
    %v126 = vsel %vm124, %v12, 16
    %v127 = vsel %vm125, %v13, 16
    %v128 = vsel %vm14, %v126, 2147483647
    %v129 = vsel %vm14, %v127, 2147483647
    %vm130 = vcmp.lt.s32.totalorder %v128, %v129
    %v131 = vsel %vm130, %v128, %v129
    %v132 = vrot.slane %v131, 4
    %vm133 = vcmp.lt.s32.totalorder %v131, %v132
    %v134 = vsel %vm133, %v131, %v132
    %v135 = vrot.slane %v134, 2
    %vm136 = vcmp.lt.s32.totalorder %v134, %v135
    %v137 = vsel %vm136, %v134, %v135
    %v138 = vrot.slane %v137, 1
    %vm139 = vcmp.lt.s32.totalorder %v137, %v138
    %v140 = vsel %vm139, %v137, %v138
    %vm141 = vcmp.ne.s32.totalorder %v12, %v140
    %vm142 = vcmp.ne.s32.totalorder %v13, %v140
    %vm143 = vmand %vm109, %vm141
    %vm144 = vmand %vm110, %vm142
    %v145 = vsel %vm143, %v9, -inf
    %v146 = vsel %vm144, %v10, -inf
    %v147 = vsel %vm14, %v145, -inf
    %v148 = vsel %vm14, %v146, -inf
    %v149 = vmax.f32 %v147, %v148
    %v150 = vrot.slane %v149, 4
    %v151 = vmax.f32 %v149, %v150
    %v152 = vrot.slane %v151, 2
    %v153 = vmax.f32 %v151, %v152
    %v154 = vrot.slane %v153, 1
    %v155 = vmax.f32 %v153, %v154
    %vm156 = vcmp.eq.f32.partialorder %v145, %v155
    %vm157 = vcmp.eq.f32.partialorder %v146, %v155
    %vm158 = vmand %vm143, %vm156
    %vm159 = vmand %vm144, %vm157
    %v160 = vsel %vm158, %v12, 16
    %v161 = vsel %vm159, %v13, 16
    %v162 = vsel %vm14, %v160, 2147483647
    %v163 = vsel %vm14, %v161, 2147483647
    %vm164 = vcmp.lt.s32.totalorder %v162, %v163
    %v165 = vsel %vm164, %v162, %v163
    %v166 = vrot.slane %v165, 4
    %vm167 = vcmp.lt.s32.totalorder %v165, %v166
    %v168 = vsel %vm167, %v165, %v166
    %v169 = vrot.slane %v168, 2
    %vm170 = vcmp.lt.s32.totalorder %v168, %v169
    %v171 = vsel %vm170, %v168, %v169
    %v172 = vrot.slane %v171, 1
    %vm173 = vcmp.lt.s32.totalorder %v171, %v172
    %v174 = vsel %vm173, %v171, %v172
    %vm175 = vcmp.ne.s32.totalorder %v12, %v174
    %vm176 = vcmp.ne.s32.totalorder %v13, %v174
    %vm177 = vmand %vm143, %vm175
    %vm178 = vmand %vm144, %vm176
    %vm179 = vmxor %vm177, 1
    %vm180 = vmxor %vm178, 1
    %v181 = vsel %vm179, %v12, 16
    %v182 = vsel %vm180, %v13, 16
    %v183 = vsel %vm14, %v181, 2147483647
    %v184 = vsel %vm14, %v182, 2147483647
    %vm185 = vcmp.lt.s32.totalorder %v183, %v184
    %v186 = vsel %vm185, %v183, %v184
    %v187 = vrot.slane %v186, 4
    %vm188 = vcmp.lt.s32.totalorder %v186, %v187
    %v189 = vsel %vm188, %v186, %v187
    %v190 = vrot.slane %v189, 2
    %vm191 = vcmp.lt.s32.totalorder %v189, %v190
    %v192 = vsel %vm191, %v189, %v190
    %v193 = vrot.slane %v192, 1
    %vm194 = vcmp.lt.s32.totalorder %v192, %v193
    %v195 = vsel %vm194, %v192, %v193
    %vm196 = vcmp.eq.s32.totalorder %v12, %v195
    %vm197 = vcmp.eq.s32.totalorder %v13, %v195
    %v198 = vsel %vm196, %v9, 0.0
    %v199 = vsel %vm197, %v10, 0.0
    %v200 = vsel %vm14, %v198, 0.0
    %v201 = vsel %vm14, %v199, 0.0
    %v202 = vadd.f32 %v200, %v201
    %v203 = vrot.slane %v202, 4
    %v204 = vadd.f32 %v202, %v203
    %v205 = vrot.slane %v204, 2
    %v206 = vadd.f32 %v204, %v205
    %v207 = vrot.slane %v206, 1
    %v208 = vadd.f32 %v206, %v207
    %vm209 = vcmask 57344
    %210 = vst.msk [vmem:[#allocation2] sm:$0x1] %vm209, %v208
    %vm211 = vcmp.ne.s32.totalorder %v12, %v195
    %vm212 = vcmp.ne.s32.totalorder %v13, %v195
    %vm213 = vmand %vm179, %vm211
    %vm214 = vmand %vm180, %vm212
    %v215 = vsel %vm213, %v12, 16
    %v216 = vsel %vm214, %v13, 16
    %v217 = vsel %vm14, %v215, 2147483647
    %v218 = vsel %vm14, %v216, 2147483647
    %vm219 = vcmp.lt.s32.totalorder %v217, %v218
    %v220 = vsel %vm219, %v217, %v218
    %v221 = vrot.slane %v220, 4
    %vm222 = vcmp.lt.s32.totalorder %v220, %v221
    %v223 = vsel %vm222, %v220, %v221
    %v224 = vrot.slane %v223, 2
    %vm225 = vcmp.lt.s32.totalorder %v223, %v224
    %v226 = vsel %vm225, %v223, %v224
    %v227 = vrot.slane %v226, 1
    %vm228 = vcmp.lt.s32.totalorder %v226, %v227
    %v229 = vsel %vm228, %v226, %v227
    %vm230 = vcmp.eq.s32.totalorder %v12, %v229
    %vm231 = vcmp.eq.s32.totalorder %v13, %v229
    %v232 = vsel %vm230, %v9, 0.0
    %v233 = vsel %vm231, %v10, 0.0
    %v234 = vsel %vm14, %v232, 0.0
    %v235 = vsel %vm14, %v233, 0.0
    %v236 = vadd.f32 %v234, %v235
    %v237 = vrot.slane %v236, 4
    %v238 = vadd.f32 %v236, %v237
    %v239 = vrot.slane %v238, 2
    %v240 = vadd.f32 %v238, %v239
    %v241 = vrot.slane %v240, 1
    %v242 = vadd.f32 %v240, %v241
    %243 = vst.msk [vmem:[#allocation2 + $0x1] sm:$0x1] %vm209, %v242
    %vm244 = vcmp.ne.s32.totalorder %v12, %v229
    %vm245 = vcmp.ne.s32.totalorder %v13, %v229
    %vm246 = vmand %vm213, %vm244
    %vm247 = vmand %vm214, %vm245
    %v248 = vsel %vm246, %v12, 16
    %v249 = vsel %vm247, %v13, 16
    %v250 = vsel %vm14, %v248, 2147483647
    %v251 = vsel %vm14, %v249, 2147483647
    %vm252 = vcmp.lt.s32.totalorder %v250, %v251
    %v253 = vsel %vm252, %v250, %v251
    %v254 = vrot.slane %v253, 4
    %vm255 = vcmp.lt.s32.totalorder %v253, %v254
    %v256 = vsel %vm255, %v253, %v254
    %v257 = vrot.slane %v256, 2
    %vm258 = vcmp.lt.s32.totalorder %v256, %v257
    %v259 = vsel %vm258, %v256, %v257
    %v260 = vrot.slane %v259, 1
    %vm261 = vcmp.lt.s32.totalorder %v259, %v260
    %v262 = vsel %vm261, %v259, %v260
    %vm263 = vcmp.eq.s32.totalorder %v12, %v262
    %vm264 = vcmp.eq.s32.totalorder %v13, %v262
    %v265 = vsel %vm263, %v9, 0.0
    %v266 = vsel %vm264, %v10, 0.0
    %v267 = vsel %vm14, %v265, 0.0
    %v268 = vsel %vm14, %v266, 0.0
    %v269 = vadd.f32 %v267, %v268
    %v270 = vrot.slane %v269, 4
    %v271 = vadd.f32 %v269, %v270
    %v272 = vrot.slane %v271, 2
    %v273 = vadd.f32 %v271, %v272
    %v274 = vrot.slane %v273, 1
    %v275 = vadd.f32 %v273, %v274
    %276 = vst.msk [vmem:[#allocation2 + $0x2] sm:$0x1] %vm209, %v275
    %vm277 = vcmp.ne.s32.totalorder %v12, %v262
    %vm278 = vcmp.ne.s32.totalorder %v13, %v262
    %vm279 = vmand %vm246, %vm277
    %vm280 = vmand %vm247, %vm278
    %v281 = vsel %vm279, %v12, 16
    %v282 = vsel %vm280, %v13, 16
    %v283 = vsel %vm14, %v281, 2147483647
    %v284 = vsel %vm14, %v282, 2147483647
    %vm285 = vcmp.lt.s32.totalorder %v283, %v284
    %v286 = vsel %vm285, %v283, %v284
    %v287 = vrot.slane %v286, 4
    %vm288 = vcmp.lt.s32.totalorder %v286, %v287
    %v289 = vsel %vm288, %v286, %v287
    %v290 = vrot.slane %v289, 2
    %vm291 = vcmp.lt.s32.totalorder %v289, %v290
    %v292 = vsel %vm291, %v289, %v290
    %v293 = vrot.slane %v292, 1
    %vm294 = vcmp.lt.s32.totalorder %v292, %v293
    %v295 = vsel %vm294, %v292, %v293
    %vm296 = vcmp.eq.s32.totalorder %v12, %v295
    %vm297 = vcmp.eq.s32.totalorder %v13, %v295
    %v298 = vsel %vm296, %v9, 0.0
    %v299 = vsel %vm297, %v10, 0.0
    %v300 = vsel %vm14, %v298, 0.0
    %v301 = vsel %vm14, %v299, 0.0
    %v302 = vadd.f32 %v300, %v301
    %v303 = vrot.slane %v302, 4
    %v304 = vadd.f32 %v302, %v303
    %v305 = vrot.slane %v304, 2
    %v306 = vadd.f32 %v304, %v305
    %v307 = vrot.slane %v306, 1
    %v308 = vadd.f32 %v306, %v307
    %309 = vst.msk [vmem:[#allocation2 + $0x3] sm:$0x1] %vm209, %v308
    %vm310 = vcmp.ne.s32.totalorder %v12, %v295
    %vm311 = vcmp.ne.s32.totalorder %v13, %v295
    %vm312 = vmand %vm279, %vm310
    %vm313 = vmand %vm280, %vm311
    %v314 = vsel %vm312, %v12, 16
    %v315 = vsel %vm313, %v13, 16
    %v316 = vsel %vm14, %v314, 2147483647
    %v317 = vsel %vm14, %v315, 2147483647
    %vm318 = vcmp.lt.s32.totalorder %v316, %v317
    %v319 = vsel %vm318, %v316, %v317
    %v320 = vrot.slane %v319, 4
    %vm321 = vcmp.lt.s32.totalorder %v319, %v320
    %v322 = vsel %vm321, %v319, %v320
    %v323 = vrot.slane %v322, 2
    %vm324 = vcmp.lt.s32.totalorder %v322, %v323
    %v325 = vsel %vm324, %v322, %v323
    %v326 = vrot.slane %v325, 1
    %vm327 = vcmp.lt.s32.totalorder %v325, %v326
    %v328 = vsel %vm327, %v325, %v326
    %vm329 = vcmp.eq.s32.totalorder %v12, %v328
    %vm330 = vcmp.eq.s32.totalorder %v13, %v328
    %v331 = vsel %vm329, %v9, 0.0
    %v332 = vsel %vm330, %v10, 0.0
    %v333 = vsel %vm14, %v331, 0.0
    %v334 = vsel %vm14, %v332, 0.0
    %v335 = vadd.f32 %v333, %v334
    %v336 = vrot.slane %v335, 4
    %v337 = vadd.f32 %v335, %v336
    %v338 = vrot.slane %v337, 2
    %v339 = vadd.f32 %v337, %v338
    %v340 = vrot.slane %v339, 1
    %v341 = vadd.f32 %v339, %v340
    %342 = vst.msk [vmem:[#allocation2 + $0x4] sm:$0x1] %vm209, %v341
    // Predicated region
    $region6: #{tpu_custom_call.1} parent=1 // pred_check
      _
    $region7: #{tpu_custom_call.1} parent=1 // pred_check_branch
      %344 = sbr.rel (0) target = $region9
    $region8: #{tpu_custom_call.1} parent=1 // pred_region
      %s346 = ssub.s32 128, 128
      %347 = vsyncadd [#allocation3], %s346
      %s349 = sshll.u32 [#allocation2], 4
      %s350 = int_to_ptr.vmem [resolvable:$true] %s349
      %352 = dma.vmem_to_hbm [thread:$0]  %s350, 128, %s1, [#allocation3]
    $region9: #{tpu_custom_call.1} parent=1 // pred_fallthru
      _
    // Predicated region
    $region10: #{tpu_custom_call.1} parent=1 // pred_check
      _
    $region11: #{tpu_custom_call.1} parent=1 // pred_check_branch
      %354 = sbr.rel (0) target = $region13
    $region12: #{tpu_custom_call.1} parent=1 // pred_region
      %355 = dma.done [#allocation3], 128
    $region13: #{tpu_custom_call.1} parent=1 // pred_fallthru
      _
    %356 = vsyncpa [#allocation3], 1

</llo_original>
